<compile_context>
chip_gen: v7x
topology: tpu7x:2x2x1
jax: 0.10.0
libtpu: 0.0.40
codegen_flags: <defaults>
</compile_context>

<pallas_src>
import functools

import jax
import jax.numpy as jnp
from jax.experimental import pallas as pl
from jax.experimental.pallas import tpu as pltpu

IN_DIM = 424
HID_DIM = 200
HID_PAD = 256    # 200 -> 256: hidden activations fill whole 128-lane vregs
OUT_DIM = 38
OUT_PAD = 128    # 38 -> 128: lane-dense output -> unmasked stores, clean MXU N
TB_MAX = 1024    # batch tile; ~5 MB VMEM at tb=1024 -> fits v5e/v6e/v7x defaults
ALIGN = 16       # sublane alignment (covers bf16 x tiles too)


def _round_up(n, m):
    return ((n + m - 1) // m) * m


def pnn_kernel(x_ref, w1_ref, b1_ref, w2_ref, b2_ref, o_ref):
    # (TB, 424)bf16 @ (424, 256)bf16 -> f32 acc -> +b1 -> ReLU
    x = x_ref[...].astype(jnp.bfloat16)
    h = jnp.dot(x, w1_ref[...], preferred_element_type=jnp.float32)
    h = jnp.maximum(h + b1_ref[...], 0.0)
    # (TB, 256)bf16 @ (256, 128)bf16 -> f32 acc -> +b2 -> (TB, 128) lane-dense store
    y = jnp.dot(h.astype(jnp.bfloat16), w2_ref[...],
                preferred_element_type=jnp.float32)
    o_ref[...] = (y + b2_ref[...]).astype(o_ref.dtype)


@functools.partial(jax.jit, static_argnames=("tb_max",))
def pnn_forward(x, w1, b1, w2, b2, tb_max=TB_MAX):
    """x: (B, 424); w1: (424, 200); b1: (200,); w2: (200, 38); b2: (38,)."""
    B = x.shape[0]

    # Weights once-cast to bf16 (MXU operands); biases stay f32 (exact add).
    # Hidden dim zero-padded to 256 lanes, output dim zero-padded to 128 lanes.
    w1p = jnp.pad(w1, ((0, 0), (0, HID_PAD - HID_DIM))).astype(jnp.bfloat16)
    b1p = jnp.pad(b1.astype(jnp.float32), ((0, HID_PAD - HID_DIM),)).reshape(1, HID_PAD)
    w2p = jnp.pad(w2, ((0, HID_PAD - HID_DIM), (0, OUT_PAD - OUT_DIM))
                  ).astype(jnp.bfloat16)
    b2p = jnp.pad(b2.astype(jnp.float32), ((0, OUT_PAD - OUT_DIM),)).reshape(1, OUT_PAD)

    # Tile selection: split the batch evenly into n_steps tiles so padding waste
    # is <= ALIGN rows per step, and force >=2 steps (v7x megacore) when B >= 32.
    b_al = _round_up(B, ALIGN)
    n_steps = pl.cdiv(b_al, tb_max)
    if b_al >= 2 * ALIGN:
        n_steps = max(n_steps, 2)
    tb = _round_up(pl.cdiv(b_al, n_steps), ALIGN)
    b_pad = n_steps * tb

    # x stays in its native dtype (cast to bf16 inside the kernel).
    xp = x
    if b_pad != B:
        xp = jnp.pad(xp, ((0, b_pad - B), (0, 0)))

    out = pl.pallas_call(
        pnn_kernel,
        out_shape=jax.ShapeDtypeStruct((b_pad, OUT_PAD), jnp.float32),
        grid_spec=pltpu.PrefetchScalarGridSpec(
            num_scalar_prefetch=0,
            grid=(n_steps,),
            in_specs=[
                pl.BlockSpec((tb, IN_DIM), lambda i: (i, 0)),         # x tile (pipelined)
                pl.BlockSpec((IN_DIM, HID_PAD), lambda i: (0, 0)),    # W1 (resident)
                pl.BlockSpec((1, HID_PAD), lambda i: (0, 0)),         # b1 (resident)
                pl.BlockSpec((HID_PAD, OUT_PAD), lambda i: (0, 0)),   # W2 (resident)
                pl.BlockSpec((1, OUT_PAD), lambda i: (0, 0)),         # b2 (resident)
            ],
            out_specs=pl.BlockSpec((tb, OUT_PAD), lambda i: (i, 0)),
        ),
        compiler_params=pltpu.CompilerParams(
            dimension_semantics=("parallel",),
        ),
    )(xp, w1p, b1p, w2p, b2p)
    return out[:B, :OUT_DIM]


def init_params(key):
    # PyTorch default Linear init: U(-1/sqrt(fan_in), 1/sqrt(fan_in)).
    k1, k2, k3, k4 = jax.random.split(key, 4)
    bound1 = 1.0 / float(IN_DIM) ** 0.5
    bound2 = 1.0 / float(HID_DIM) ** 0.5
    w1 = jax.random.uniform(k1, (IN_DIM, HID_DIM), jnp.float32, -bound1, bound1)
    b1 = jax.random.uniform(k2, (HID_DIM,), jnp.float32, -bound1, bound1)
    w2 = jax.random.uniform(k3, (HID_DIM, OUT_DIM), jnp.float32, -bound2, bound2)
    b2 = jax.random.uniform(k4, (OUT_DIM,), jnp.float32, -bound2, bound2)
    return w1, b1, w2, b2


if __name__ == "__main__":
    key = jax.random.PRNGKey(0)
    k_x, k_p = jax.random.split(key)

    B = 16  # small test batch; wrapper pads/tiles as needed
    x = jax.random.normal(k_x, (B, IN_DIM), jnp.float32)
    w1, b1, w2, b2 = init_params(k_p)

    out = jax.block_until_ready(pnn_forward(x, w1, b1, w2, b2))

    # Reference in plain JAX (same math as the PyTorch module), f32 throughout.
    ref = jnp.maximum(x @ w1 + b1, 0.0) @ w2 + b2
    assert out.shape == (B, OUT_DIM)
    # bf16 matmul operands (f32 accumulation) -> loosen tolerance accordingly.
    assert jnp.allclose(out, ref, atol=2e-2, rtol=2e-2)

    print("KERNEL_OK")
</pallas_src>

<mosaic_0001>
module attributes {stable_mosaic.version = 11 : i64} {
  func.func @pnn_kernel(%arg0: i32, %arg1: memref<16x424xf32, #tpu.memory_space<vmem>>, %arg2: memref<424x256xbf16, #tpu.memory_space<vmem>>, %arg3: memref<1x256xf32, #tpu.memory_space<vmem>>, %arg4: memref<256x128xbf16, #tpu.memory_space<vmem>>, %arg5: memref<1x128xf32, #tpu.memory_space<vmem>>, %arg6: memref<16x128xf32, #tpu.memory_space<vmem>>) attributes {dimension_semantics = [#tpu.dimension_semantics<parallel>], iteration_bounds = array<i64: 1>, scalar_prefetch = 0 : i64, scratch_operands = 0 : i64, tpu.core_type = #tpu.core_type<tc>, window_params = [{transform_indices = @transform_0, window_bounds = array<i64: 16, 424>}, {pipeline_mode = #tpu.pipeline_mode<synchronous>, transform_indices = @transform_1, window_bounds = array<i64: 424, 256>}, {pipeline_mode = #tpu.pipeline_mode<synchronous>, transform_indices = @transform_2, window_bounds = array<i64: 1, 256>}, {pipeline_mode = #tpu.pipeline_mode<synchronous>, transform_indices = @transform_3, window_bounds = array<i64: 256, 128>}, {pipeline_mode = #tpu.pipeline_mode<synchronous>, transform_indices = @transform_4, window_bounds = array<i64: 1, 128>}, {transform_indices = @transform_5, window_bounds = array<i64: 16, 128>}]} {
    %c0 = arith.constant 0 : index
    %c0_0 = arith.constant 0 : index
    %0 = vector.load %arg1[%c0, %c0_0] : memref<16x424xf32, #tpu.memory_space<vmem>>, vector<16x424xf32>
    %1 = arith.truncf %0 : vector<16x424xf32> to vector<16x424xbf16>
    %c0_1 = arith.constant 0 : index
    %c0_2 = arith.constant 0 : index
    %2 = vector.load %arg2[%c0_1, %c0_2] : memref<424x256xbf16, #tpu.memory_space<vmem>>, vector<424x256xbf16>
    %cst = arith.constant dense<0.000000e+00> : vector<16x256xf32>
    %3 = tpu.matmul %1, %2, %cst {dimension_numbers = #tpu.dot_dimension_numbers<[1], [0], [0], [1], [0, 0, 1, 1], [], []>} : vector<16x424xbf16>, vector<424x256xbf16>, vector<16x256xf32> -> vector<16x256xf32>
    %c0_3 = arith.constant 0 : index
    %c0_4 = arith.constant 0 : index
    %4 = vector.load %arg3[%c0_3, %c0_4] : memref<1x256xf32, #tpu.memory_space<vmem>>, vector<1x256xf32>
    %5 = vector.broadcast %4 : vector<1x256xf32> to vector<16x256xf32>
    %6 = arith.addf %3, %5 : vector<16x256xf32>
    %cst_5 = arith.constant 0.000000e+00 : f32
    %7 = vector.broadcast %cst_5 : f32 to vector<16x256xf32>
    %8 = arith.maximumf %6, %7 : vector<16x256xf32>
    %9 = arith.truncf %8 : vector<16x256xf32> to vector<16x256xbf16>
    %c0_6 = arith.constant 0 : index
    %c0_7 = arith.constant 0 : index
    %10 = vector.load %arg4[%c0_6, %c0_7] : memref<256x128xbf16, #tpu.memory_space<vmem>>, vector<256x128xbf16>
    %cst_8 = arith.constant dense<0.000000e+00> : vector<16x128xf32>
    %11 = tpu.matmul %9, %10, %cst_8 {dimension_numbers = #tpu.dot_dimension_numbers<[1], [0], [0], [1], [0, 0, 1, 1], [], []>} : vector<16x256xbf16>, vector<256x128xbf16>, vector<16x128xf32> -> vector<16x128xf32>
    %c0_9 = arith.constant 0 : index
    %c0_10 = arith.constant 0 : index
    %12 = vector.load %arg5[%c0_9, %c0_10] : memref<1x128xf32, #tpu.memory_space<vmem>>, vector<1x128xf32>
    %13 = vector.broadcast %12 : vector<1x128xf32> to vector<16x128xf32>
    %14 = arith.addf %11, %13 : vector<16x128xf32>
    %c0_11 = arith.constant 0 : index
    %c0_12 = arith.constant 0 : index
    %15 = vector.load %arg6[%c0_11, %c0_12] : memref<16x128xf32, #tpu.memory_space<vmem>>, vector<16x128xf32>
    tpu.vector_store %arg6[%c0_11, %c0_12], %14 {strides = array<i32>} : memref<16x128xf32, #tpu.memory_space<vmem>>, vector<16x128xf32>,
    return
  }
  func.func @transform_0(%arg0: i32) -> (i32, i32) {
    %c0_i32 = arith.constant 0 : i32
    %c0_i32_0 = arith.constant 0 : i32
    return %arg0, %c0_i32 : i32, i32
  }
  func.func @transform_1(%arg0: i32) -> (i32, i32) {
    %c0_i32 = arith.constant 0 : i32
    %c0_i32_0 = arith.constant 0 : i32
    %c0_i32_1 = arith.constant 0 : i32
    return %c0_i32, %c0_i32_0 : i32, i32
  }
  func.func @transform_2(%arg0: i32) -> (i32, i32) {
    %c0_i32 = arith.constant 0 : i32
    %c0_i32_0 = arith.constant 0 : i32
    %c0_i32_1 = arith.constant 0 : i32
    return %c0_i32, %c0_i32_0 : i32, i32
  }
  func.func @transform_3(%arg0: i32) -> (i32, i32) {
    %c0_i32 = arith.constant 0 : i32
    %c0_i32_0 = arith.constant 0 : i32
    %c0_i32_1 = arith.constant 0 : i32
    return %c0_i32, %c0_i32_0 : i32, i32
  }
  func.func @transform_4(%arg0: i32) -> (i32, i32) {
    %c0_i32 = arith.constant 0 : i32
    %c0_i32_0 = arith.constant 0 : i32
    %c0_i32_1 = arith.constant 0 : i32
    return %c0_i32, %c0_i32_0 : i32, i32
  }
  func.func @transform_5(%arg0: i32) -> (i32, i32) {
    %c0_i32 = arith.constant 0 : i32
    %c0_i32_0 = arith.constant 0 : i32
    return %arg0, %c0_i32 : i32, i32
  }
}

</mosaic_0001>

<llo_original>
// kernel: pnn_forward.1
$region0: #{pnn_forward.1}
  #allocation0 [shape = 'u32[]', space=smem, size = 0x4, offset = 0x4, fixed_abs, tag = 'smem constant byte address 0x4 - core index']
  #allocation1 [shape = 'u32[144,128]{1,0:T(1,128)}', space=vmem, size = 0x12000, scoped, tag = 'internal scratch']
  %s0 = inlined_call_operand.vmem [shape: f32[16,424], index: 0, kind: input, shape index: {}]
  %s1 = inlined_call_operand.vmem [shape: bf16[424,256], index: 1, kind: input, shape index: {}]
  %s2 = inlined_call_operand.vmem [shape: f32[1,256], index: 2, kind: input, shape index: {}]
  %s3 = inlined_call_operand.vmem [shape: bf16[256,128], index: 3, kind: input, shape index: {}]
  %s4 = inlined_call_operand.vmem [shape: f32[1,128], index: 4, kind: input, shape index: {}]
  %s5 = inlined_call_operand.hbm [shape: f32[16,128], index: 5, kind: output, shape index: {}]
  %s6 = sld [smem:[#allocation0]]
  $region30: #{pnn_forward.1} parent=0
    _
  %s8 = ssub.s32 1, %s6
  %s9 = scalar_select 0, %s8, %s6
  $region1: #{pnn_forward.1} parent=0
    #allocation2 [shape = 'u8[8192]{0}', space=vmem, size = 0x2000, scoped, tag = 'output window, operand 0, single buffered']
    #allocation3 [shape = 's32[1]{0}', space=sflag, size = 0x4, scoped, tag = 'scoped memory for pnn_forward.1']
    %10 = vsyncpa [#allocation3], 0
    // Predicated region
    $region2: #{pnn_forward.1} parent=1 // pred_check
      _
    $region3: #{pnn_forward.1} parent=1 // pred_check_branch
      %12 = sbr.rel (0) target = $region5
    $region4: #{pnn_forward.1} parent=1 // pred_region
      _
    $region5: #{pnn_forward.1} parent=1 // pred_fallthru
      _
    // Predicated region
    $region6: #{pnn_forward.1} parent=1 // pred_check
      _
    $region7: #{pnn_forward.1} parent=1 // pred_check_branch
      %14 = sbr.rel (0) target = $region9
    $region8: #{pnn_forward.1} parent=1 // pred_region
      _
    $region9: #{pnn_forward.1} parent=1 // pred_fallthru
      _
    // Predicated region
    $region10: #{pnn_forward.1} parent=1 // pred_check
      _
    $region11: #{pnn_forward.1} parent=1 // pred_check_branch
      %16 = sbr.rel (0) target = $region13
    $region12: #{pnn_forward.1} parent=1 // pred_region
      _
    $region13: #{pnn_forward.1} parent=1 // pred_fallthru
      _
    // Predicated region
    $region14: #{pnn_forward.1} parent=1 // pred_check
      _
    $region15: #{pnn_forward.1} parent=1 // pred_check_branch
      %18 = sbr.rel (0) target = $region17
    $region16: #{pnn_forward.1} parent=1 // pred_region
      _
    $region17: #{pnn_forward.1} parent=1 // pred_fallthru
      _
    // Predicated region
    $region18: #{pnn_forward.1} parent=1 // pred_check
      _
    $region19: #{pnn_forward.1} parent=1 // pred_check_branch
      %20 = sbr.rel (0) target = $region21
    $region20: #{pnn_forward.1} parent=1 // pred_region
      _
    $region21: #{pnn_forward.1} parent=1 // pred_fallthru
      _
    %v22 = vld [vmem:[%s0] sm:$0xff]
    %v23 = vld [vmem:[%s0 + $0x8] sm:$0xff]
    %v24 = vld [vmem:[%s0 + $0x10] sm:$0xff]
    %v25 = vld [vmem:[%s0 + $0x18] sm:$0xff]
    %v26 = vld [vmem:[%s0 + $0x20] sm:$0xff]
    %v27 = vld [vmem:[%s0 + $0x28] sm:$0xff]
    %v28 = vld [vmem:[%s0 + $0x30] sm:$0xff]
    %v29 = vld [vmem:[%s0 + $0x38] sm:$0xff]
    %v30 = vpack.c.bf16 %v26, %v22
    %v31 = vpack.c.bf16 %v27, %v23
    %v32 = vpack.c.bf16 %v28, %v24
    %v33 = vpack.c.bf16 %v29, %v25
    %v34 = vld [vmem:[%s1] sm:$0xff]
    %v35 = vld [vmem:[%s1 + $0x8] sm:$0xff]
    %v36 = vld [vmem:[%s1 + $0x10] sm:$0xff]
    %v37 = vld [vmem:[%s1 + $0x18] sm:$0xff]
    %v38 = vld [vmem:[%s1 + $0x20] sm:$0xff]
    %v39 = vld [vmem:[%s1 + $0x28] sm:$0xff]
    %v40 = vld [vmem:[%s1 + $0x30] sm:$0xff]
    %v41 = vld [vmem:[%s1 + $0x38] sm:$0xff]
    %v42 = vld [vmem:[%s1 + $0x40] sm:$0xff]
    %v43 = vld [vmem:[%s1 + $0x48] sm:$0xff]
    %v44 = vld [vmem:[%s1 + $0x50] sm:$0xff]
    %v45 = vld [vmem:[%s1 + $0x58] sm:$0xff]
    %v46 = vld [vmem:[%s1 + $0x60] sm:$0xff]
    %v47 = vld [vmem:[%s1 + $0x68] sm:$0xff]
    %v48 = vld [vmem:[%s1 + $0x70] sm:$0xff]
    %v49 = vld [vmem:[%s1 + $0x78] sm:$0xff]
    %v50 = vld [vmem:[%s1 + $0x80] sm:$0xff]
    %v51 = vld [vmem:[%s1 + $0x88] sm:$0xff]
    %v52 = vld [vmem:[%s1 + $0x90] sm:$0xff]
    %v53 = vld [vmem:[%s1 + $0x98] sm:$0xff]
    %v54 = vld [vmem:[%s1 + $0xa0] sm:$0xff]
    %v55 = vld [vmem:[%s1 + $0xa8] sm:$0xff]
    %v56 = vld [vmem:[%s1 + $0xb0] sm:$0xff]
    %v57 = vld [vmem:[%s1 + $0xb8] sm:$0xff]
    %v58 = vld [vmem:[%s1 + $0xc0] sm:$0xff]
    %v59 = vld [vmem:[%s1 + $0xc8] sm:$0xff]
    %v60 = vld [vmem:[%s1 + $0xd0] sm:$0xff]
    %v61 = vld [vmem:[%s1 + $0xd8] sm:$0xff]
    %v62 = vld [vmem:[%s1 + $0xe0] sm:$0xff]
    %v63 = vld [vmem:[%s1 + $0xe8] sm:$0xff]
    %v64 = vld [vmem:[%s1 + $0xf0] sm:$0xff]
    %v65 = vld [vmem:[%s1 + $0xf8] sm:$0xff]
    %v66 = vld [vmem:[%s1 + $0x100] sm:$0xff]
    %v67 = vld [vmem:[%s1 + $0x108] sm:$0xff]
    %v68 = vld [vmem:[%s1 + $0x110] sm:$0xff]
    %v69 = vld [vmem:[%s1 + $0x118] sm:$0xff]
    %v70 = vld [vmem:[%s1 + $0x120] sm:$0xff]
    %v71 = vld [vmem:[%s1 + $0x128] sm:$0xff]
    %v72 = vld [vmem:[%s1 + $0x130] sm:$0xff]
    %v73 = vld [vmem:[%s1 + $0x138] sm:$0xff]
    %v74 = vld [vmem:[%s1 + $0x140] sm:$0xff]
    %v75 = vld [vmem:[%s1 + $0x148] sm:$0xff]
    %v76 = vld [vmem:[%s1 + $0x150] sm:$0xff]
    %v77 = vld [vmem:[%s1 + $0x158] sm:$0xff]
    %v78 = vld [vmem:[%s1 + $0x160] sm:$0xff]
    %v79 = vld [vmem:[%s1 + $0x168] sm:$0xff]
    %v80 = vld [vmem:[%s1 + $0x170] sm:$0xff]
    %v81 = vld [vmem:[%s1 + $0x178] sm:$0xff]
    %v82 = vld [vmem:[%s1 + $0x180] sm:$0xff]
    %v83 = vld [vmem:[%s1 + $0x188] sm:$0xff]
    %v84 = vld [vmem:[%s1 + $0x190] sm:$0xff]
    %v85 = vld [vmem:[%s1 + $0x198] sm:$0xff]
    %v86 = vld [vmem:[%s1 + $0x1a0] sm:$0xff]
    %v87 = vld [vmem:[%s2] sm:$0x3]
    %v89 = vlaneseq
    %v90 = vshrl.u32 %v89, 7
    %v91 = vsub.s32 0, %v90
    %v92 = vrot.slane %v87, %v91
    %v93 = vlaneseq
    %v94 = vshrl.u32 %v93, 7
    %v95 = vsub.s32 1, %v94
    %v96 = vrot.slane %v87, %v95
    %v152 = vunpack.c.l.b16 %v34
    %v153 = vunpack.c.h.b16 %v34
    %v154 = vunpack.c.l.b16 %v35
    %v155 = vunpack.c.h.b16 %v35
    %v156 = vunpack.c.l.b16 %v36
    %v157 = vunpack.c.h.b16 %v36
    %v158 = vunpack.c.l.b16 %v37
    %v159 = vunpack.c.h.b16 %v37
    %v160 = vunpack.c.l.b16 %v38
    %v161 = vunpack.c.h.b16 %v38
    %v162 = vunpack.c.l.b16 %v39
    %v163 = vunpack.c.h.b16 %v39
    %v164 = vunpack.c.l.b16 %v40
    %v165 = vunpack.c.h.b16 %v40
    %v166 = vunpack.c.l.b16 %v41
    %v167 = vunpack.c.h.b16 %v41
    %v168 = vunpack.c.l.b16 %v42
    %v169 = vunpack.c.h.b16 %v42
    %v170 = vunpack.c.l.b16 %v43
    %v171 = vunpack.c.h.b16 %v43
    %v172 = vunpack.c.l.b16 %v44
    %v173 = vunpack.c.h.b16 %v44
    %v174 = vunpack.c.l.b16 %v45
    %v175 = vunpack.c.h.b16 %v45
    %v176 = vunpack.c.l.b16 %v46
    %v177 = vunpack.c.h.b16 %v46
    %v178 = vunpack.c.l.b16 %v47
    %v179 = vunpack.c.h.b16 %v47
    %v180 = vunpack.c.l.b16 %v48
    %v181 = vunpack.c.h.b16 %v48
    %v182 = vunpack.c.l.b16 %v49
    %v183 = vunpack.c.h.b16 %v49
    %v184 = vunpack.c.l.b16 %v50
    %v185 = vunpack.c.h.b16 %v50
    %v186 = vunpack.c.l.b16 %v51
    %v187 = vunpack.c.h.b16 %v51
    %v188 = vunpack.c.l.b16 %v52
    %v189 = vunpack.c.h.b16 %v52
    %v190 = vunpack.c.l.b16 %v53
    %v191 = vunpack.c.h.b16 %v53
    %v192 = vunpack.c.l.b16 %v54
    %v193 = vunpack.c.h.b16 %v54
    %v194 = vunpack.c.l.b16 %v55
    %v195 = vunpack.c.h.b16 %v55
    %v196 = vunpack.c.l.b16 %v56
    %v197 = vunpack.c.h.b16 %v56
    %v198 = vunpack.c.l.b16 %v57
    %v199 = vunpack.c.h.b16 %v57
    %v200 = vunpack.c.l.b16 %v58
    %v201 = vunpack.c.h.b16 %v58
    %v202 = vunpack.c.l.b16 %v59
    %v203 = vunpack.c.h.b16 %v59
    %v204 = vunpack.c.l.b16 %v60
    %v205 = vunpack.c.h.b16 %v60
    %v206 = vunpack.c.l.b16 %v61
    %v207 = vunpack.c.h.b16 %v61
    %v208 = vunpack.c.l.b16 %v62
    %v209 = vunpack.c.h.b16 %v62
    %v210 = vunpack.c.l.b16 %v63
    %v211 = vunpack.c.h.b16 %v63
    %v212 = vunpack.c.l.b16 %v64
    %v213 = vunpack.c.h.b16 %v64
    %v214 = vunpack.c.l.b16 %v65
    %v215 = vunpack.c.h.b16 %v65
    %v216 = vunpack.c.l.b16 %v66
    %v217 = vunpack.c.h.b16 %v66
    %v218 = vunpack.c.l.b16 %v67
    %v219 = vunpack.c.h.b16 %v67
    %v220 = vunpack.c.l.b16 %v68
    %v221 = vunpack.c.h.b16 %v68
    %v222 = vunpack.c.l.b16 %v69
    %v223 = vunpack.c.h.b16 %v69
    %v224 = vunpack.c.l.b16 %v70
    %v225 = vunpack.c.h.b16 %v70
    %v226 = vunpack.c.l.b16 %v71
    %v227 = vunpack.c.h.b16 %v71
    %v228 = vunpack.c.l.b16 %v72
    %v229 = vunpack.c.h.b16 %v72
    %v230 = vunpack.c.l.b16 %v73
    %v231 = vunpack.c.h.b16 %v73
    %v232 = vunpack.c.l.b16 %v74
    %v233 = vunpack.c.h.b16 %v74
    %v234 = vunpack.c.l.b16 %v75
    %v235 = vunpack.c.h.b16 %v75
    %v236 = vunpack.c.l.b16 %v76
    %v237 = vunpack.c.h.b16 %v76
    %v238 = vunpack.c.l.b16 %v77
    %v239 = vunpack.c.h.b16 %v77
    %v240 = vunpack.c.l.b16 %v78
    %v241 = vunpack.c.h.b16 %v78
    %v242 = vunpack.c.l.b16 %v79
    %v243 = vunpack.c.h.b16 %v79
    %v244 = vunpack.c.l.b16 %v80
    %v245 = vunpack.c.h.b16 %v80
    %v246 = vunpack.c.l.b16 %v81
    %v247 = vunpack.c.h.b16 %v81
    %v248 = vunpack.c.l.b16 %v82
    %v249 = vunpack.c.h.b16 %v82
    %v250 = vunpack.c.l.b16 %v83
    %v251 = vunpack.c.h.b16 %v83
    %v252 = vunpack.c.l.b16 %v84
    %v253 = vunpack.c.h.b16 %v84
    %v254 = vunpack.c.l.b16 %v85
    %v255 = vunpack.c.h.b16 %v85
    %v256 = vunpack.c.l.b16 %v86
    %v257 = vunpack.c.h.b16 %v86
    %v258 = vpack.c.b16 %v154, %v152
    %v259 = vpack.c.b16 %v155, %v153
    %v260 = vpack.c.b16 %v158, %v156
    %v261 = vpack.c.b16 %v159, %v157
    %v262 = vpack.c.b16 %v162, %v160
    %v263 = vpack.c.b16 %v163, %v161
    %v264 = vpack.c.b16 %v166, %v164
    %v265 = vpack.c.b16 %v167, %v165
    %v266 = vpack.c.b16 %v170, %v168
    %v267 = vpack.c.b16 %v171, %v169
    %v268 = vpack.c.b16 %v174, %v172
    %v269 = vpack.c.b16 %v175, %v173
    %v270 = vpack.c.b16 %v178, %v176
    %v271 = vpack.c.b16 %v179, %v177
    %v272 = vpack.c.b16 %v182, %v180
    %v273 = vpack.c.b16 %v183, %v181
    %v274 = vpack.c.b16 %v186, %v184
    %v275 = vpack.c.b16 %v187, %v185
    %v276 = vpack.c.b16 %v190, %v188
    %v277 = vpack.c.b16 %v191, %v189
    %v278 = vpack.c.b16 %v194, %v192
    %v279 = vpack.c.b16 %v195, %v193
    %v280 = vpack.c.b16 %v198, %v196
    %v281 = vpack.c.b16 %v199, %v197
    %v282 = vpack.c.b16 %v202, %v200
    %v283 = vpack.c.b16 %v203, %v201
    %v284 = vpack.c.b16 %v206, %v204
    %v285 = vpack.c.b16 %v207, %v205
    %v286 = vpack.c.b16 %v210, %v208
    %v287 = vpack.c.b16 %v211, %v209
    %v288 = vpack.c.b16 %v214, %v212
    %v289 = vpack.c.b16 %v215, %v213
    %v290 = vpack.c.b16 %v218, %v216
    %v291 = vpack.c.b16 %v219, %v217
    %v292 = vpack.c.b16 %v222, %v220
    %v293 = vpack.c.b16 %v223, %v221
    %v294 = vpack.c.b16 %v226, %v224
    %v295 = vpack.c.b16 %v227, %v225
    %v296 = vpack.c.b16 %v230, %v228
    %v297 = vpack.c.b16 %v231, %v229
    %v298 = vpack.c.b16 %v234, %v232
    %v299 = vpack.c.b16 %v235, %v233
    %v300 = vpack.c.b16 %v238, %v236
    %v301 = vpack.c.b16 %v239, %v237
    %v302 = vpack.c.b16 %v242, %v240
    %v303 = vpack.c.b16 %v243, %v241
    %v304 = vpack.c.b16 %v246, %v244
    %v305 = vpack.c.b16 %v247, %v245
    %v306 = vpack.c.b16 %v250, %v248
    %v307 = vpack.c.b16 %v251, %v249
    %v308 = vpack.c.b16 %v254, %v252
    %v309 = vpack.c.b16 %v255, %v253
    %v310 = vpack.c.b16 %v256, %v256
    %v311 = vpack.c.b16 %v257, %v257
    %vm364 = vcmask 326656
    %v366 = vsel %vm364, %v33, 0
    %vm368 = vcmask 1043456
    %v370 = vsel %vm368, %v310, 0
    %v373 = vsel %vm368, %v311, 0
    %375 = vmatprep.subr.bf16.mxu0 %v259
    %376 = vmatpush1.bf16.msra.mxu0 %v258
    %377 = vmatprep.subr.bf16.mxu0 %v261
    %378 = vmatpush1.bf16.msra.mxu0 %v260
    %379 = vmatprep.subr.bf16.mxu0 %v263
    %380 = vmatpush1.bf16.msra.mxu0 %v262
    %381 = vmatprep.subr.bf16.mxu0 %v265
    %382 = vmatpush1.bf16.msra.mxu0 %v264
    %383 = vmatprep.subr.bf16.mxu0 %v267
    %384 = vmatpush1.bf16.msra.mxu0 %v266
    %385 = vmatprep.subr.bf16.mxu0 %v269
    %386 = vmatpush1.bf16.msra.mxu0 %v268
    %387 = vmatprep.subr.bf16.mxu0 %v271
    %388 = vmatpush1.bf16.msra.mxu0 %v270
    %389 = vmatprep.subr.bf16.mxu0 %v273
    %390 = vmatpush1.bf16.msra.mxu0 %v272
    %391 = vmatprep.subr.bf16.mxu0 %v275
    %392 = vmatpush1.bf16.msra.mxu0 %v274
    %393 = vmatprep.subr.bf16.mxu0 %v277
    %394 = vmatpush1.bf16.msra.mxu0 %v276
    %395 = vmatprep.subr.bf16.mxu0 %v279
    %396 = vmatpush1.bf16.msra.mxu0 %v278
    %397 = vmatprep.subr.bf16.mxu0 %v281
    %398 = vmatpush1.bf16.msra.mxu0 %v280
    %399 = vmatprep.subr.bf16.mxu0 %v283
    %400 = vmatpush1.bf16.msra.mxu0 %v282
    %401 = vmatprep.subr.bf16.mxu0 %v285
    %402 = vmatpush1.bf16.msra.mxu0 %v284
    %403 = vmatprep.subr.bf16.mxu0 %v287
    %404 = vmatpush1.bf16.msra.mxu0 %v286
    %405 = vmatprep.subr.bf16.mxu0 %v289
    %406 = vmatpush1.bf16.msra.mxu0 %v288
    %407 = vmatprep.mubr.bf16.mxu0 %v31
    %408 = vmatmul.mubr.bf16.gmra.mrb[0].mxu0 %v30
    %v409 = vpop.f32.mrb[0].mxu0
    %v410 = vadd.f32 %v92, %v409
    %v411 = vpop.f32.mrb[0].mxu0
    %v412 = vadd.f32 %v96, %v411
    %v413 = vpop.f32.mrb[0].mxu0
    %v414 = vadd.f32 %v92, %v413
    %v415 = vpop.f32.mrb[0].mxu0
    %v416 = vadd.f32 %v96, %v415
    %417 = vdwg.mxu0
    %418 = vmatprep.subr.bf16.mxu0 %v291
    %419 = vmatpush1.bf16.msra.mxu0 %v290
    %420 = vmatprep.subr.bf16.mxu0 %v293
    %421 = vmatpush1.bf16.msra.mxu0 %v292
    %422 = vmatprep.subr.bf16.mxu0 %v295
    %423 = vmatpush1.bf16.msra.mxu0 %v294
    %424 = vmatprep.subr.bf16.mxu0 %v297
    %425 = vmatpush1.bf16.msra.mxu0 %v296
    %426 = vmatprep.subr.bf16.mxu0 %v299
    %427 = vmatpush1.bf16.msra.mxu0 %v298
    %428 = vmatprep.subr.bf16.mxu0 %v301
    %429 = vmatpush1.bf16.msra.mxu0 %v300
    %430 = vmatprep.subr.bf16.mxu0 %v303
    %431 = vmatpush1.bf16.msra.mxu0 %v302
    %432 = vmatprep.subr.bf16.mxu0 %v305
    %433 = vmatpush1.bf16.msra.mxu0 %v304
    %434 = vmatprep.subr.bf16.mxu0 %v307
    %435 = vmatpush1.bf16.msra.mxu0 %v306
    %436 = vmatprep.subr.bf16.mxu0 %v309
    %437 = vmatpush1.bf16.msra.mxu0 %v308
    %438 = vmatprep.subr.bf16.mxu0 %v373
    %439 = vmatpush1.bf16.msra.mxu0 %v370
    %440 = vmatprep.subr.bf16.mxu0 0
    %441 = vmatpush1.bf16.msra.mxu0 0
    %442 = vmatprep.subr.bf16.mxu0 0
    %443 = vmatpush1.bf16.msra.mxu0 0
    %444 = vmatprep.subr.bf16.mxu0 0
    %445 = vmatpush1.bf16.msra.mxu0 0
    %446 = vmatprep.subr.bf16.mxu0 0
    %447 = vmatpush1.bf16.msra.mxu0 0
    %448 = vmatprep.subr.bf16.mxu0 0
    %449 = vmatpush1.bf16.msra.mxu0 0
    %450 = vmatprep.mubr.bf16.mxu0 %v366
    %451 = vmatmul.mubr.bf16.gmra.mrb[0].mxu0 %v32
    %v452 = vpop.f32.mrb[0].mxu0
    %v453 = vadd.f32 %v410, %v452
    %v454 = vpop.f32.mrb[0].mxu0
    %v455 = vadd.f32 %v412, %v454
    %v456 = vpop.f32.mrb[0].mxu0
    %v457 = vadd.f32 %v414, %v456
    %v458 = vpop.f32.mrb[0].mxu0
    %v459 = vadd.f32 %v416, %v458
    %460 = vdwg.mxu0
    %v461 = vmax.f32 %v453, 0.0
    %v462 = vmax.f32 %v455, 0.0
    %v463 = vmax.f32 %v457, 0.0
    %v464 = vmax.f32 %v459, 0.0
    %v465 = vpack.c.bf16 %v463, %v461
    %v466 = vpack.c.bf16 %v464, %v462
    %v467 = vld [vmem:[%s3] sm:$0xf]
    %v468 = vld [vmem:[%s3 + $0x4] sm:$0xf]
    %v469 = vld [vmem:[%s3 + $0x8] sm:$0xf]
    %v470 = vld [vmem:[%s3 + $0xc] sm:$0xf]
    %v471 = vld [vmem:[%s3 + $0x10] sm:$0xf]
    %v472 = vld [vmem:[%s3 + $0x14] sm:$0xf]
    %v473 = vld [vmem:[%s3 + $0x18] sm:$0xf]
    %v474 = vld [vmem:[%s3 + $0x1c] sm:$0xf]
    %v475 = vld [vmem:[%s3 + $0x20] sm:$0xf]
    %v476 = vld [vmem:[%s3 + $0x24] sm:$0xf]
    %v477 = vld [vmem:[%s3 + $0x28] sm:$0xf]
    %v478 = vld [vmem:[%s3 + $0x2c] sm:$0xf]
    %v479 = vld [vmem:[%s3 + $0x30] sm:$0xf]
    %v480 = vld [vmem:[%s3 + $0x34] sm:$0xf]
    %v481 = vld [vmem:[%s3 + $0x38] sm:$0xf]
    %v482 = vld [vmem:[%s3 + $0x3c] sm:$0xf]
    %v483 = vld [vmem:[%s3 + $0x40] sm:$0xf]
    %v484 = vld [vmem:[%s3 + $0x44] sm:$0xf]
    %v485 = vld [vmem:[%s3 + $0x48] sm:$0xf]
    %v486 = vld [vmem:[%s3 + $0x4c] sm:$0xf]
    %v487 = vld [vmem:[%s3 + $0x50] sm:$0xf]
    %v488 = vld [vmem:[%s3 + $0x54] sm:$0xf]
    %v489 = vld [vmem:[%s3 + $0x58] sm:$0xf]
    %v490 = vld [vmem:[%s3 + $0x5c] sm:$0xf]
    %v491 = vld [vmem:[%s3 + $0x60] sm:$0xf]
    %v492 = vld [vmem:[%s3 + $0x64] sm:$0xf]
    %v493 = vld [vmem:[%s3 + $0x68] sm:$0xf]
    %v494 = vld [vmem:[%s3 + $0x6c] sm:$0xf]
    %v495 = vld [vmem:[%s3 + $0x70] sm:$0xf]
    %v496 = vld [vmem:[%s3 + $0x74] sm:$0xf]
    %v497 = vld [vmem:[%s3 + $0x78] sm:$0xf]
    %v498 = vld [vmem:[%s3 + $0x7c] sm:$0xf]
    %v499 = vld [vmem:[%s4] sm:$0x1]
    %v501 = vlaneseq
    %v502 = vshrl.u32 %v501, 7
    %v503 = vsub.s32 0, %v502
    %v504 = vrot.slane %v499, %v503
    %v538 = vunpack.c.l.b16 %v467
    %v539 = vunpack.c.l.b16 %v468
    %v540 = vunpack.c.l.b16 %v469
    %v541 = vunpack.c.l.b16 %v470
    %v542 = vunpack.c.l.b16 %v471
    %v543 = vunpack.c.l.b16 %v472
    %v544 = vunpack.c.l.b16 %v473
    %v545 = vunpack.c.l.b16 %v474
    %v546 = vunpack.c.l.b16 %v475
    %v547 = vunpack.c.l.b16 %v476
    %v548 = vunpack.c.l.b16 %v477
    %v549 = vunpack.c.l.b16 %v478
    %v550 = vunpack.c.l.b16 %v479
    %v551 = vunpack.c.l.b16 %v480
    %v552 = vunpack.c.l.b16 %v481
    %v553 = vunpack.c.l.b16 %v482
    %v554 = vunpack.c.l.b16 %v483
    %v555 = vunpack.c.l.b16 %v484
    %v556 = vunpack.c.l.b16 %v485
    %v557 = vunpack.c.l.b16 %v486
    %v558 = vunpack.c.l.b16 %v487
    %v559 = vunpack.c.l.b16 %v488
    %v560 = vunpack.c.l.b16 %v489
    %v561 = vunpack.c.l.b16 %v490
    %v562 = vunpack.c.l.b16 %v491
    %v563 = vunpack.c.l.b16 %v492
    %v564 = vunpack.c.l.b16 %v493
    %v565 = vunpack.c.l.b16 %v494
    %v566 = vunpack.c.l.b16 %v495
    %v567 = vunpack.c.l.b16 %v496
    %v568 = vunpack.c.l.b16 %v497
    %v569 = vunpack.c.l.b16 %v498
    %v570 = vpack.c.b16 %v539, %v538
    %v571 = vpack.c.b16 %v541, %v540
    %v572 = vpack.c.b16 %v543, %v542
    %v573 = vpack.c.b16 %v545, %v544
    %v574 = vpack.c.b16 %v547, %v546
    %v575 = vpack.c.b16 %v549, %v548
    %v576 = vpack.c.b16 %v551, %v550
    %v577 = vpack.c.b16 %v553, %v552
    %v578 = vpack.c.b16 %v555, %v554
    %v579 = vpack.c.b16 %v557, %v556
    %v580 = vpack.c.b16 %v559, %v558
    %v581 = vpack.c.b16 %v561, %v560
    %v582 = vpack.c.b16 %v563, %v562
    %v583 = vpack.c.b16 %v565, %v564
    %v584 = vpack.c.b16 %v567, %v566
    %v585 = vpack.c.b16 %v569, %v568
    %602 = vmatprep.subr.bf16.mxu0 0
    %603 = vmatpush1.bf16.msra.mxu0 %v570
    %604 = vmatprep.subr.bf16.mxu0 0
    %605 = vmatpush1.bf16.msra.mxu0 %v571
    %606 = vmatprep.subr.bf16.mxu0 0
    %607 = vmatpush1.bf16.msra.mxu0 %v572
    %608 = vmatprep.subr.bf16.mxu0 0
    %609 = vmatpush1.bf16.msra.mxu0 %v573
    %610 = vmatprep.subr.bf16.mxu0 0
    %611 = vmatpush1.bf16.msra.mxu0 %v574
    %612 = vmatprep.subr.bf16.mxu0 0
    %613 = vmatpush1.bf16.msra.mxu0 %v575
    %614 = vmatprep.subr.bf16.mxu0 0
    %615 = vmatpush1.bf16.msra.mxu0 %v576
    %616 = vmatprep.subr.bf16.mxu0 0
    %617 = vmatpush1.bf16.msra.mxu0 %v577
    %618 = vmatprep.subr.bf16.mxu0 0
    %619 = vmatpush1.bf16.msra.mxu0 %v578
    %620 = vmatprep.subr.bf16.mxu0 0
    %621 = vmatpush1.bf16.msra.mxu0 %v579
    %622 = vmatprep.subr.bf16.mxu0 0
    %623 = vmatpush1.bf16.msra.mxu0 %v580
    %624 = vmatprep.subr.bf16.mxu0 0
    %625 = vmatpush1.bf16.msra.mxu0 %v581
    %626 = vmatprep.subr.bf16.mxu0 0
    %627 = vmatpush1.bf16.msra.mxu0 %v582
    %628 = vmatprep.subr.bf16.mxu0 0
    %629 = vmatpush1.bf16.msra.mxu0 %v583
    %630 = vmatprep.subr.bf16.mxu0 0
    %631 = vmatpush1.bf16.msra.mxu0 %v584
    %632 = vmatprep.subr.bf16.mxu0 0
    %633 = vmatpush1.bf16.msra.mxu0 %v585
    %634 = vmatprep.mubr.bf16.mxu0 %v466
    %635 = vmatmul.mubr.bf16.gmra.mrb[0].mxu0 %v465
    %v636 = vpop.f32.mrb[0].mxu0
    %v637 = vadd.f32 %v504, %v636
    %v638 = vpop.f32.mrb[0].mxu0
    %v639 = vpop.f32.mrb[0].mxu0
    %v640 = vadd.f32 %v504, %v639
    %v641 = vpop.f32.mrb[0].mxu0
    %642 = vdwg.mxu0
    %643 = vst [vmem:[#allocation2] sm:$0xff] %v637
    %644 = vst [vmem:[#allocation2 + $0x8] sm:$0xff] %v640
    // Predicated region
    $region22: #{pnn_forward.1} parent=1 // pred_check
      _
    $region23: #{pnn_forward.1} parent=1 // pred_check_branch
      %646 = sbr.rel (0) target = $region25
    $region24: #{pnn_forward.1} parent=1 // pred_region
      %s648 = ssub.s32 256, 256
      %649 = vsyncadd [#allocation3], %s648
      %s650 = sshll.u32 [#allocation2], 4
      %s651 = int_to_ptr.vmem [resolvable:$true] %s650
      %656 = dma.vmem_to_hbm [thread:$0]  %s651, 256, %s5, [#allocation3], 128, 128, 8
    $region25: #{pnn_forward.1} parent=1 // pred_fallthru
      _
    // Predicated region
    $region26: #{pnn_forward.1} parent=1 // pred_check
      _
    $region27: #{pnn_forward.1} parent=1 // pred_check_branch
      %658 = sbr.rel (0) target = $region29
    $region28: #{pnn_forward.1} parent=1 // pred_region
      %659 = dma.done [#allocation3], 256
    $region29: #{pnn_forward.1} parent=1 // pred_fallthru
      _
    %660 = vsyncpa [#allocation3], 1

</llo_original>
